<compile_context>
chip_gen: v7x
topology: tpu7x:2x2x1
jax: 0.10.0
libtpu: 0.0.40
codegen_flags: <defaults>
</compile_context>

<pallas_src>
import jax
import jax.numpy as jnp
from jax.experimental import pallas as pl
from jax.experimental.pallas import tpu as pltpu


def _learnable_bias_kernel(x_ref, b_ref, o_ref):
    # x_ref / o_ref: (ROWS, LANES) VMEM tiles.
    # b_ref: (ROWS, 1) column (lane broadcast) or (1, LANES) row (sublane
    # broadcast). Either way this is a plain VPU add per vreg.
    o_ref[...] = x_ref[...] + b_ref[...]


def _sublane_multiple(dtype) -> int:
    # Min second-to-last block dim for unpadded tiles:
    # f32 -> 8, bf16/f16 -> 16, int8/fp8 -> 32.
    itemsize = jnp.dtype(dtype).itemsize
    return max(8, 32 // itemsize)


def _round_up(a: int, b: int) -> int:
    return -(-a // b) * b


def _default_target_tile_bytes() -> int:
    # v7x (3.2 TB/s, 64 MiB VMEM): bigger tiles amortize per-step overhead.
    # v5e/v6e: ~1 MiB tiles already sit at >=85% of the HBM roofline, and the
    # explicit vmem_limit_bytes below is what keeps this safe on v5e's 16 MiB
    # default scoped VMEM.
    try:
        kind = jax.devices()[0].device_kind.lower()
    except Exception:
        return 1 << 20
    if "v7" in kind:
        return 4 << 20
    return 1 << 20


def learnable_bias(
    x: jax.Array,
    bias: jax.Array,
    *,
    target_tile_bytes: int | None = None,
    lane_block_cap: int = 8192,          # multiple of 128
    vmem_limit_bytes: int = 32 * 1024 * 1024,
    donate_x: bool = False,
) -> jax.Array:
    """x: (N, C, H, W); bias: (1, C, 1, 1) -> x + bias broadcast over N, H, W."""
    N, C, H, W = x.shape
    L = H * W
    dtype = x.dtype
    itemsize = jnp.dtype(dtype).itemsize
    if target_tile_bytes is None:
        target_tile_bytes = _default_target_tile_bytes()

    # ---- Layout selection (layout plumbing only; no extra compute) ----------
    # NOTE: bias is cast to x.dtype; output dtype matches x (matches the module
    # where the parameter and activations share a dtype).
    if L % 128 == 0:
        # (N*C, H*W) rows with a per-row bias column.
        R2, L2 = N * C, L
        x2 = x.reshape(R2, L2)
        bias2 = jnp.broadcast_to(
            bias.reshape(1, C).astype(dtype), (N, C)
        ).reshape(R2, 1)
        bias_is_column = True
    else:
        # Fold channels into the lane dim: (N, C*H*W) with a (1, C*H*W) bias
        # row (bias[c] repeated H*W times). For C a multiple of 128 the lane
        # dim is 128-dense even for 7x7 / 14x14 / ... feature maps.
        R2, L2 = N, C * L
        x2 = x.reshape(R2, L2)
        bias2 = jnp.broadcast_to(
            bias.reshape(C, 1).astype(dtype), (C, L)
        ).reshape(1, L2)
        bias_is_column = False

    # ---- Tile sizing ---------------------------------------------------------
    # Lane block: full extent (always legal) when small, otherwise a
    # 128-multiple cap; the trailing partial lane block is masked by Pallas.
    if L2 <= lane_block_cap:
        lane_blk = L2
    else:
        lane_blk = min(lane_block_cap, _round_up(L2, 128))

    sub = _sublane_multiple(dtype)
    row_bytes = lane_blk * itemsize
    rows_target = max(sub, (target_tile_bytes // max(row_bytes, 1)) // sub * sub)
    # Either the full row extent (always legal) or a multiple of `sub`
    # (trailing partial row blocks are masked by Pallas).
    rows = R2 if R2 <= rows_target else rows_target

    # Guarantee >=2 grid blocks when possible so v7x's two TensorCores both
    # stream data (measured-neutral on single-TC v5e/v6e).
    if pl.cdiv(R2, rows) * pl.cdiv(L2, lane_blk) < 2 and R2 >= 2 * sub:
        rows = min(rows, _round_up(pl.cdiv(R2, 2), sub))

    # VMEM guard: double-buffered (in + out + bias) tiles must fit the limit.
    def _tiles_bytes(r: int) -> int:
        x_tile = r * lane_blk * itemsize
        b_tile = (r if bias_is_column else lane_blk) * itemsize
        return 2 * (2 * x_tile + b_tile)

    vmem_budget = int(vmem_limit_bytes * 0.9)
    while rows > sub and _tiles_bytes(rows) > vmem_budget:
        rows = max(sub, (rows // 2) // sub * sub)

    grid = (pl.cdiv(R2, rows), pl.cdiv(L2, lane_blk))

    x_spec = pl.BlockSpec((rows, lane_blk), lambda i, j: (i, j))
    if bias_is_column:
        # Bias block index independent of the innermost (lane) grid axis ->
        # Pallas skips its re-DMA across lane steps.
        bias_spec = pl.BlockSpec((rows, 1), lambda i, j: (i, 0))
    else:
        # Tiny (1, lane_blk) row tile; re-DMA per lane step is negligible
        # relative to the (rows, lane_blk) x tile.
        bias_spec = pl.BlockSpec((1, lane_blk), lambda i, j: (0, j))

    out2 = pl.pallas_call(
        _learnable_bias_kernel,
        out_shape=jax.ShapeDtypeStruct((R2, L2), dtype),
        grid=grid,
        in_specs=[x_spec, bias_spec],
        out_specs=pl.BlockSpec((rows, lane_blk), lambda i, j: (i, j)),
        compiler_params=pltpu.CompilerParams(
            dimension_semantics=("parallel", "parallel"),
            vmem_limit_bytes=vmem_limit_bytes,
        ),
        # Reuse x's HBM buffer for the output when the caller donates it.
        input_output_aliases=({0: 0} if donate_x else {}),
    )(x2, bias2)

    return out2.reshape(N, C, H, W)


class LearnableBiasPallas:
    """JAX mirror of the PyTorch LearnableBias module."""

    def __init__(self, out_chn: int, dtype=jnp.float32):
        # nn.Parameter(torch.zeros(1, out_chn, 1, 1)) — zero init.
        self.bias = jnp.zeros((1, out_chn, 1, 1), dtype=dtype)

    def __call__(self, x: jax.Array) -> jax.Array:
        return learnable_bias(x, self.bias)


if __name__ == "__main__":
    key = jax.random.PRNGKey(0)
    kx, kb, kx2, kb2 = jax.random.split(key, 4)

    # Case 1: H*W a multiple of 128 -> (N*C, H*W) column-bias path.
    N, C, H, W = 2, 4, 16, 16
    x = jax.random.normal(kx, (N, C, H, W), dtype=jnp.float32)
    module = LearnableBiasPallas(C)
    # Give the (normally zero-init) bias deterministic nonzero values so the
    # broadcast-add path is actually exercised.
    module.bias = jax.random.normal(kb, (1, C, 1, 1), dtype=jnp.float32)
    out = jax.block_until_ready(module(x))
    ref = x + module.bias
    assert out.shape == x.shape and out.dtype == x.dtype
    assert jnp.allclose(out, ref, atol=1e-6, rtol=1e-6)

    # Case 2: H*W NOT a multiple of 128 (7x7) -> folded (N, C*H*W) row-bias path.
    N2, C2, H2, W2 = 2, 8, 7, 7
    x_b = jax.random.normal(kx2, (N2, C2, H2, W2), dtype=jnp.float32)
    bias_b = jax.random.normal(kb2, (1, C2, 1, 1), dtype=jnp.float32)
    out_b = jax.block_until_ready(learnable_bias(x_b, bias_b))
    ref_b = x_b + bias_b
    assert out_b.shape == x_b.shape and out_b.dtype == x_b.dtype
    assert jnp.allclose(out_b, ref_b, atol=1e-6, rtol=1e-6)

    print("KERNEL_OK")
</pallas_src>

<mosaic_0001>
module attributes {stable_mosaic.version = 11 : i64} {
  func.func @_learnable_bias_kernel(%arg0: i32, %arg1: i32, %arg2: memref<8x256xf32, #tpu.memory_space<vmem>>, %arg3: memref<8x1xf32, #tpu.memory_space<vmem>>, %arg4: memref<8x256xf32, #tpu.memory_space<vmem>>) attributes {dimension_semantics = [#tpu.dimension_semantics<parallel>, #tpu.dimension_semantics<parallel>], iteration_bounds = array<i64: 1, 1>, scalar_prefetch = 0 : i64, scratch_operands = 0 : i64, tpu.core_type = #tpu.core_type<tc>, window_params = [{transform_indices = @transform_0, window_bounds = array<i64: 8, 256>}, {transform_indices = @transform_1, window_bounds = array<i64: 8, 1>}, {transform_indices = @transform_2, window_bounds = array<i64: 8, 256>}]} {
    %c0 = arith.constant 0 : index
    %c0_0 = arith.constant 0 : index
    %0 = vector.load %arg2[%c0, %c0_0] : memref<8x256xf32, #tpu.memory_space<vmem>>, vector<8x256xf32>
    %c0_1 = arith.constant 0 : index
    %c0_2 = arith.constant 0 : index
    %1 = vector.load %arg3[%c0_1, %c0_2] : memref<8x1xf32, #tpu.memory_space<vmem>>, vector<8x1xf32>
    %2 = vector.broadcast %1 : vector<8x1xf32> to vector<8x256xf32>
    %3 = arith.addf %0, %2 : vector<8x256xf32>
    %c0_3 = arith.constant 0 : index
    %c0_4 = arith.constant 0 : index
    %4 = vector.load %arg4[%c0_3, %c0_4] : memref<8x256xf32, #tpu.memory_space<vmem>>, vector<8x256xf32>
    tpu.vector_store %arg4[%c0_3, %c0_4], %3 {strides = array<i32>} : memref<8x256xf32, #tpu.memory_space<vmem>>, vector<8x256xf32>,
    return
  }
  func.func @transform_0(%arg0: i32, %arg1: i32) -> (i32, i32) {
    %c0_i32 = arith.constant 0 : i32
    return %arg0, %arg1 : i32, i32
  }
  func.func @transform_1(%arg0: i32, %arg1: i32) -> (i32, i32) {
    %c0_i32 = arith.constant 0 : i32
    %c0_i32_0 = arith.constant 0 : i32
    return %arg0, %c0_i32 : i32, i32
  }
  func.func @transform_2(%arg0: i32, %arg1: i32) -> (i32, i32) {
    %c0_i32 = arith.constant 0 : i32
    return %arg0, %arg1 : i32, i32
  }
}

</mosaic_0001>

<llo_original>
// kernel: tpu_custom_call.1
$region0: #{tpu_custom_call.1}
  #allocation0 [shape = 'u32[]', space=smem, size = 0x4, offset = 0x4, fixed_abs, tag = 'smem constant byte address 0x4 - core index']
  #allocation1 [shape = 'u32[144,128]{1,0:T(1,128)}', space=vmem, size = 0x12000, scoped, tag = 'internal scratch']
  %s0 = inlined_call_operand.hbm [shape: f32[8,256], index: 0, kind: input, shape index: {}]
  %s1 = inlined_call_operand.vmem [shape: f32[8,1], index: 1, kind: input, shape index: {}]
  %s2 = inlined_call_operand.hbm [shape: f32[8,256], index: 2, kind: output, shape index: {}]
  %s3 = sld [smem:[#allocation0]]
  $region22: #{tpu_custom_call.1} parent=0
    _
  %s5 = ssub.s32 1, %s3
  %s6 = scalar_select 0, %s5, %s3
  $region1: #{tpu_custom_call.1} parent=0
    #allocation2 [shape = 'u8[8192]{0}', space=vmem, size = 0x2000, scoped, tag = 'input window, operand 0, single buffered']
    #allocation3 [shape = 's32[1]{0}', space=sflag, size = 0x4, scoped, tag = 'scoped memory for tpu_custom_call.1']
    #allocation4 [shape = 's32[1]{0}', space=sflag, size = 0x4, scoped, tag = 'scoped memory for tpu_custom_call.1']
    #allocation5 [shape = 'u8[8192]{0}', space=vmem, size = 0x2000, scoped, tag = 'output window, operand 0, single buffered']
    %7 = vsyncpa [#allocation3], 0
    %8 = vsyncpa [#allocation4], 0
    // Predicated region
    $region2: #{tpu_custom_call.1} parent=1 // pred_check
      _
    $region3: #{tpu_custom_call.1} parent=1 // pred_check_branch
      %10 = sbr.rel (0) target = $region5
    $region4: #{tpu_custom_call.1} parent=1 // pred_region
      %s12 = ssub.s32 256, 256
      %13 = vsyncadd [#allocation3], %s12
      %s15 = sshll.u32 [#allocation2], 4
      %s16 = int_to_ptr.vmem [resolvable:$true] %s15
      %18 = dma.hbm_to_vmem [thread:$0]  %s0, 256, %s16, [#allocation3]
    $region5: #{tpu_custom_call.1} parent=1 // pred_fallthru
      _
    // Predicated region
    $region6: #{tpu_custom_call.1} parent=1 // pred_check
      _
    $region7: #{tpu_custom_call.1} parent=1 // pred_check_branch
      %20 = sbr.rel (0) target = $region9
    $region8: #{tpu_custom_call.1} parent=1 // pred_region
      _
    $region9: #{tpu_custom_call.1} parent=1 // pred_fallthru
      _
    // Predicated region
    $region10: #{tpu_custom_call.1} parent=1 // pred_check
      _
    $region11: #{tpu_custom_call.1} parent=1 // pred_check_branch
      %22 = sbr.rel (0) target = $region13
    $region12: #{tpu_custom_call.1} parent=1 // pred_region
      %23 = dma.done [#allocation3], 256
    $region13: #{tpu_custom_call.1} parent=1 // pred_fallthru
      _
    %v24 = vld [vmem:[#allocation2] sm:$0xff]
    %v25 = vld [vmem:[#allocation2 + $0x8] sm:$0xff]
    %v26 = vld [vmem:[%s1] sm:$0xff]
    %28 = vset.pattern.permute.xlu0 0
    %29 = vperm.xlu0 %28, %v26
    %v30 = vpop.permute.xlu0 %29
    %v32 = vadd.f32 %v24, %v30
    %v33 = vadd.f32 %v25, %v30
    %34 = vst [vmem:[#allocation5] sm:$0xff] %v32
    %35 = vst [vmem:[#allocation5 + $0x8] sm:$0xff] %v33
    // Predicated region
    $region14: #{tpu_custom_call.1} parent=1 // pred_check
      _
    $region15: #{tpu_custom_call.1} parent=1 // pred_check_branch
      %37 = sbr.rel (0) target = $region17
    $region16: #{tpu_custom_call.1} parent=1 // pred_region
      %s39 = ssub.s32 256, 256
      %40 = vsyncadd [#allocation4], %s39
      %s42 = sshll.u32 [#allocation5], 4
      %s43 = int_to_ptr.vmem [resolvable:$true] %s42
      %45 = dma.vmem_to_hbm [thread:$0]  %s43, 256, %s2, [#allocation4]
    $region17: #{tpu_custom_call.1} parent=1 // pred_fallthru
      _
    // Predicated region
    $region18: #{tpu_custom_call.1} parent=1 // pred_check
      _
    $region19: #{tpu_custom_call.1} parent=1 // pred_check_branch
      %47 = sbr.rel (0) target = $region21
    $region20: #{tpu_custom_call.1} parent=1 // pred_region
      %48 = dma.done [#allocation4], 256
    $region21: #{tpu_custom_call.1} parent=1 // pred_fallthru
      _
    %49 = vsyncpa [#allocation3], 1
    %50 = vsyncpa [#allocation4], 1

</llo_original>
